<compile_context>
chip_gen: v7x
topology: tpu7x:2x2x1
jax: 0.10.0
libtpu: 0.0.40
codegen_flags: <defaults>
</compile_context>

<pallas_src>
import functools

import jax
import jax.numpy as jnp
from jax.experimental import pallas as pl
from jax.experimental.pallas import tpu as pltpu


_LANE = 128
_SUBLANE = 8
# Per-row VMEM cost model (bytes): 2x double-buffered input + ~4 f32 tile-sized
# temporaries (f32 upcast, exp, iota/onehot, masked select) ...
_F32_TILE_TEMPS = 4
# ... plus ~6 lane-padded (tile_n, 1) f32 column vectors (scratch + live temps):
# each costs 128 lanes * 4 B = 512 B per row once laid out in (8,128) tiles.
_COL_TEMP_BYTES_PER_ROW = 6 * _LANE * 4


def _round_up(x, m):
    return ((x + m - 1) // m) * m


def _vmem_budget():
    """Generation-aware VMEM sizing -> (tile-sizing budget, vmem_limit_bytes)."""
    cap = 64 * 1024 * 1024                       # conservative (v7x-sized) fallback
    try:
        info = pltpu.get_tpu_info()
        cap = int(getattr(info, "vmem_capacity_bytes", cap)) or cap
    except Exception:
        pass
    budget = (cap * 5) // 8                      # ~40 MiB on v7x, ~80 MiB on v5e/v6e
    limit = min(cap - (4 << 20), budget + (24 << 20))
    return budget, int(limit)


def _choose_tiles(n, c, itemsize, budget):
    """Byte-targeted (tile_n, tile_c) given the per-kernel VMEM budget."""
    n8 = _round_up(max(n, 1), _SUBLANE)
    c_lanes = _round_up(max(c, 1), _LANE)
    per_elem = 2 * itemsize + _F32_TILE_TEMPS * 4
    per_row_full = c_lanes * per_elem + _COL_TEMP_BYTES_PER_ROW

    # Preferred: whole class axis in one block, row tile as large as the budget allows.
    if per_row_full * min(n8, 128) <= budget:
        tn = min((budget // per_row_full) // _SUBLANE * _SUBLANE, n8)
        return (n if tn >= n else tn), c

    # Vocab-scale C: 2-D grid with an online logsumexp over lane-aligned C tiles.
    tn = min(256, n8)
    if tn >= n:
        tn = n
    tc = (budget - tn * _COL_TEMP_BYTES_PER_ROW) // max(tn * per_elem, 1)
    tc = max(_LANE, (tc // _LANE) * _LANE)
    if tc >= c:
        return tn, c
    return tn, tc


def _finish_focal(ce, alpha_t, gamma):
    """(1 - exp(-ce))**gamma * ce [* alpha_t], with integer gamma on the VPU."""
    pt = jnp.exp(-ce)
    base = 1.0 - pt                                   # >= 0 because ce >= 0
    g = float(gamma)
    if g.is_integer() and 0 <= g <= 8:
        weight = jnp.ones_like(base)
        for _ in range(int(g)):
            weight = weight * base
    else:
        weight = jnp.power(base, jnp.float32(g))
    focal = weight * ce
    if alpha_t is not None:
        focal = alpha_t * focal
    return focal


def _focal_single_c_body(logits_ref, targets_ref, alpha_ref, out_ref, *,
                         gamma, scalar_reduce, n_total, tile_n, has_alpha,
                         mask_rows):
    """1-D grid over row tiles; the full class axis fits in one block."""
    i = pl.program_id(0)
    logits = logits_ref[...].astype(jnp.float32)                  # [T, C]
    tgt = targets_ref[...]                                        # [T, 1] int32
    t, c = logits.shape

    class_ids = jax.lax.broadcasted_iota(jnp.int32, (t, c), 1)
    onehot = class_ids == tgt                                     # [T, C]

    row_max = jnp.max(logits, axis=-1, keepdims=True)
    lse = row_max + jnp.log(jnp.sum(jnp.exp(logits - row_max),
                                    axis=-1, keepdims=True))
    tgt_logit = jnp.sum(jnp.where(onehot, logits, 0.0), axis=-1, keepdims=True)
    ce = jnp.maximum(lse - tgt_logit, 0.0)                        # [T, 1]

    alpha_t = None
    if has_alpha:
        alpha = alpha_ref[...].astype(jnp.float32)                # [1, C]
        alpha_t = jnp.sum(jnp.where(onehot, alpha, 0.0), axis=-1, keepdims=True)

    focal = _finish_focal(ce, alpha_t, gamma)                     # [T, 1]

    if mask_rows:
        row_ids = i * tile_n + jax.lax.broadcasted_iota(jnp.int32, (t, 1), 0)
        focal = jnp.where(row_ids < n_total, focal, 0.0)

    if scalar_reduce:
        out_ref[...] = jnp.sum(focal, axis=0, keepdims=True).reshape(1, 1, 1)
    else:
        out_ref[...] = focal


def _focal_multi_c_body(logits_ref, targets_ref, alpha_ref, out_ref,
                        m_ref, l_ref, tgt_ref, at_ref, *,
                        gamma, scalar_reduce, n_total, c_total, tile_n, tile_c,
                        has_alpha, mask_rows, mask_cols):
    """2-D grid (row tiles x C tiles) with an online logsumexp over C."""
    i = pl.program_id(0)
    j = pl.program_id(1)

    logits = logits_ref[...].astype(jnp.float32)                  # [T, Ct]
    tgt = targets_ref[...]                                        # [T, 1] int32
    t, ct = logits.shape

    col_ids = j * tile_c + jax.lax.broadcasted_iota(jnp.int32, (t, ct), 1)
    if mask_cols:
        # Garbage columns of a partial last C block must not pollute max/sum.
        logits = jnp.where(col_ids < c_total, logits, -jnp.inf)
    onehot = col_ids == tgt                                       # never true on garbage cols

    blk_max = jnp.max(logits, axis=-1, keepdims=True)             # [T, 1]
    blk_tgt = jnp.sum(jnp.where(onehot, logits, 0.0), axis=-1, keepdims=True)
    if has_alpha:
        alpha = alpha_ref[...].astype(jnp.float32)                # [1, Ct]
        blk_at = jnp.sum(jnp.where(onehot, alpha, 0.0), axis=-1, keepdims=True)

    @pl.when(j == 0)
    def _():
        m_ref[...] = jnp.full_like(m_ref, -jnp.inf)
        l_ref[...] = jnp.zeros_like(l_ref)
        tgt_ref[...] = jnp.zeros_like(tgt_ref)
        if has_alpha:
            at_ref[...] = jnp.zeros_like(at_ref)

    m_old = m_ref[...]
    m_new = jnp.maximum(m_old, blk_max)
    p_sum = jnp.sum(jnp.exp(logits - m_new), axis=-1, keepdims=True)
    l_ref[...] = l_ref[...] * jnp.exp(m_old - m_new) + p_sum
    m_ref[...] = m_new
    tgt_ref[...] = tgt_ref[...] + blk_tgt
    if has_alpha:
        at_ref[...] = at_ref[...] + blk_at

    @pl.when(j == pl.num_programs(1) - 1)
    def _():
        lse = m_ref[...] + jnp.log(l_ref[...])
        ce = jnp.maximum(lse - tgt_ref[...], 0.0)
        alpha_t = at_ref[...] if has_alpha else None
        focal = _finish_focal(ce, alpha_t, gamma)                 # [T, 1]
        if mask_rows:
            row_ids = i * tile_n + jax.lax.broadcasted_iota(jnp.int32, (t, 1), 0)
            focal = jnp.where(row_ids < n_total, focal, 0.0)
        if scalar_reduce:
            out_ref[...] = jnp.sum(focal, axis=0, keepdims=True).reshape(1, 1, 1)
        else:
            out_ref[...] = focal


def focal_loss(inputs, targets, gamma=2.0, alpha=None, reduction="mean", *,
               tile_n=None, tile_c=None):
    """Pallas TPU implementation of FocalLoss.forward.

    inputs:  [N, C] float logits (f32 or bf16; bf16 halves HBM read traffic and
             is upcast to f32 inside the kernel)
    targets: [N]    int class labels
    alpha:   optional [C] float per-class weights
    reduction: 'mean' | 'sum' | anything-else -> 'none'
    tile_n/tile_c: optional overrides (testing / tuning); defaults are chosen
             from the TPU generation's VMEM capacity.
    """
    n, c = inputs.shape
    has_alpha = alpha is not None
    scalar_reduce = reduction in ("mean", "sum")

    budget, vmem_limit = _vmem_budget()
    auto_tn, auto_tc = _choose_tiles(n, c, inputs.dtype.itemsize, budget)
    tile_n = auto_tn if tile_n is None else min(int(tile_n), n)
    tile_c = auto_tc if tile_c is None else min(int(tile_c), c)

    grid_n = pl.cdiv(n, tile_n)
    grid_c = pl.cdiv(c, tile_c)
    mask_rows = grid_n * tile_n != n
    mask_cols = grid_c * tile_c != c
    multi_c = grid_c > 1

    targets_2d = targets.astype(jnp.int32).reshape(n, 1)
    args = [inputs, targets_2d]

    if multi_c:
        grid = (grid_n, grid_c)                       # C innermost (reduction axis last)
        dim_sem = ("parallel", "arbitrary")
        in_specs = [pl.BlockSpec((tile_n, tile_c), lambda i, j: (i, j)),
                    pl.BlockSpec((tile_n, 1), lambda i, j: (i, 0))]
        if has_alpha:
            in_specs.append(pl.BlockSpec((1, tile_c), lambda i, j: (0, j)))
        if scalar_reduce:
            out_shape = jax.ShapeDtypeStruct((grid_n, 1, 1), jnp.float32)
            out_spec = pl.BlockSpec((1, 1, 1), lambda i, j: (i, 0, 0))
        else:
            out_shape = jax.ShapeDtypeStruct((n, 1), jnp.float32)
            out_spec = pl.BlockSpec((tile_n, 1), lambda i, j: (i, 0))
        scratch = [pltpu.VMEM((tile_n, 1), jnp.float32)] * (4 if has_alpha else 3)

        body = functools.partial(
            _focal_multi_c_body, gamma=gamma, scalar_reduce=scalar_reduce,
            n_total=n, c_total=c, tile_n=tile_n, tile_c=tile_c,
            has_alpha=has_alpha, mask_rows=mask_rows, mask_cols=mask_cols)

        if has_alpha:
            def kernel(lg, tg, al, o, m_s, l_s, t_s, a_s):
                body(lg, tg, al, o, m_s, l_s, t_s, a_s)
        else:
            def kernel(lg, tg, o, m_s, l_s, t_s):
                body(lg, tg, None, o, m_s, l_s, t_s, None)
    else:
        grid = (grid_n,)
        dim_sem = ("parallel",)
        in_specs = [pl.BlockSpec((tile_n, c), lambda i: (i, 0)),
                    pl.BlockSpec((tile_n, 1), lambda i: (i, 0))]
        if has_alpha:
            in_specs.append(pl.BlockSpec((1, c), lambda i: (0, 0)))
        if scalar_reduce:
            out_shape = jax.ShapeDtypeStruct((grid_n, 1, 1), jnp.float32)
            out_spec = pl.BlockSpec((1, 1, 1), lambda i: (i, 0, 0))
        else:
            out_shape = jax.ShapeDtypeStruct((n, 1), jnp.float32)
            out_spec = pl.BlockSpec((tile_n, 1), lambda i: (i, 0))
        scratch = []

        body = functools.partial(
            _focal_single_c_body, gamma=gamma, scalar_reduce=scalar_reduce,
            n_total=n, tile_n=tile_n, has_alpha=has_alpha, mask_rows=mask_rows)

        if has_alpha:
            def kernel(lg, tg, al, o):
                body(lg, tg, al, o)
        else:
            def kernel(lg, tg, o):
                body(lg, tg, None, o)

    if has_alpha:
        args.append(jnp.asarray(alpha, dtype=jnp.float32).reshape(1, c))

    out = pl.pallas_call(
        kernel,
        out_shape=out_shape,
        grid=grid,
        in_specs=in_specs,
        out_specs=out_spec,
        scratch_shapes=scratch,
        compiler_params=pltpu.CompilerParams(
            dimension_semantics=dim_sem,
            vmem_limit_bytes=int(vmem_limit)),
    )(*args)

    if reduction == "mean":
        return jnp.sum(out) / jnp.float32(n)     # total N, not tile rows
    if reduction == "sum":
        return jnp.sum(out)
    return out[:, 0]


def _focal_loss_ref(inputs, targets, gamma=2.0, alpha=None, reduction="mean"):
    """Pure-JAX reference mirroring the PyTorch module."""
    logp = jax.nn.log_softmax(inputs.astype(jnp.float32), axis=-1)
    ce = -jnp.take_along_axis(logp, targets[:, None].astype(jnp.int32),
                              axis=-1)[:, 0]
    pt = jnp.exp(-ce)
    focal = (1.0 - pt) ** gamma * ce
    if alpha is not None:
        focal = jnp.asarray(alpha, jnp.float32)[targets] * focal
    if reduction == "mean":
        return focal.mean()
    if reduction == "sum":
        return focal.sum()
    return focal


if __name__ == "__main__":
    key = jax.random.PRNGKey(0)
    k1, k2, k3, k4, k5, k6 = jax.random.split(key, 6)

    # 1) Default module config: gamma=2.0, alpha=None, reduction='mean'.
    N, C = 8, 32
    logits = jax.random.normal(k1, (N, C), dtype=jnp.float32)
    targets = jax.random.randint(k2, (N,), 0, C, dtype=jnp.int32)
    alpha = jnp.linspace(0.5, 1.5, C, dtype=jnp.float32)

    out = focal_loss(logits, targets, gamma=2.0, alpha=None, reduction="mean")
    jax.block_until_ready(out)
    ref = _focal_loss_ref(logits, targets, gamma=2.0, alpha=None, reduction="mean")
    assert jnp.allclose(out, ref, rtol=1e-5, atol=1e-5), (out, ref)

    # 2) alpha gather + 'none' reduction.
    out2 = focal_loss(logits, targets, gamma=2.0, alpha=alpha, reduction="none")
    jax.block_until_ready(out2)
    ref2 = _focal_loss_ref(logits, targets, gamma=2.0, alpha=alpha, reduction="none")
    assert jnp.allclose(out2, ref2, rtol=1e-5, atol=1e-5)

    # 3) bf16 logits, 'sum' reduction (single big row tile, no padding).
    N2, C2 = 600, 32
    logits2 = jax.random.normal(k3, (N2, C2), dtype=jnp.float32).astype(jnp.bfloat16)
    targets2 = jax.random.randint(k4, (N2,), 0, C2, dtype=jnp.int32)
    out3 = focal_loss(logits2, targets2, gamma=2.0, alpha=None, reduction="sum")
    jax.block_until_ready(out3)
    ref3 = _focal_loss_ref(logits2, targets2, gamma=2.0, alpha=None, reduction="sum")
    assert jnp.allclose(out3, ref3, rtol=1e-3, atol=1e-2), (out3, ref3)

    # 4) Forced small tiles: multi-row-tile + multi-C-tile online logsumexp path,
    #    partial blocks on both axes, alpha, 'mean' (parallel per-tile partials).
    N3, C3 = 100, 160
    logits3 = jax.random.normal(k5, (N3, C3), dtype=jnp.float32)
    targets3 = jax.random.randint(k6, (N3,), 0, C3, dtype=jnp.int32)
    alpha3 = jnp.linspace(0.25, 2.0, C3, dtype=jnp.float32)
    out4 = focal_loss(logits3, targets3, gamma=2.0, alpha=alpha3, reduction="mean",
                      tile_n=32, tile_c=128)
    jax.block_until_ready(out4)
    ref4 = _focal_loss_ref(logits3, targets3, gamma=2.0, alpha=alpha3, reduction="mean")
    assert jnp.allclose(out4, ref4, rtol=1e-5, atol=1e-5), (out4, ref4)

    # 5) Same forced tiles with reduction='none' (per-row output through the
    #    online-lse path, partial last row block write).
    out5 = focal_loss(logits3, targets3, gamma=2.0, alpha=None, reduction="none",
                      tile_n=32, tile_c=128)
    jax.block_until_ready(out5)
    ref5 = _focal_loss_ref(logits3, targets3, gamma=2.0, alpha=None, reduction="none")
    assert jnp.allclose(out5, ref5, rtol=1e-5, atol=1e-5)

    # 6) Forced multi-row-tile single-C path with a partial last row block, 'sum'.
    out6 = focal_loss(logits3[:, :32], targets3 % 32, gamma=2.0, alpha=None,
                      reduction="sum", tile_n=32)
    jax.block_until_ready(out6)
    ref6 = _focal_loss_ref(logits3[:, :32], targets3 % 32, gamma=2.0, alpha=None,
                           reduction="sum")
    assert jnp.allclose(out6, ref6, rtol=1e-5, atol=1e-4), (out6, ref6)

    print("KERNEL_OK")
</pallas_src>

<mosaic_0001>
module attributes {stable_mosaic.version = 11 : i64} {
  func.func @kernel(%arg0: i32, %arg1: memref<8x32xf32, #tpu.memory_space<vmem>>, %arg2: memref<8x1xi32, #tpu.memory_space<vmem>>, %arg3: memref<1x1x1xf32, #tpu.memory_space<vmem>>) attributes {dimension_semantics = [#tpu.dimension_semantics<parallel>], iteration_bounds = array<i64: 1>, scalar_prefetch = 0 : i64, scratch_operands = 0 : i64, tpu.core_type = #tpu.core_type<tc>, window_params = [{transform_indices = @transform_0, window_bounds = array<i64: 8, 32>}, {transform_indices = @transform_1, window_bounds = array<i64: 8, 1>}, {transform_indices = @transform_2, window_bounds = array<i64: 1, 1, 1>}]} {
    %c0 = arith.constant 0 : index
    %c0_0 = arith.constant 0 : index
    %0 = vector.load %arg1[%c0, %c0_0] : memref<8x32xf32, #tpu.memory_space<vmem>>, vector<8x32xf32>
    %c0_1 = arith.constant 0 : index
    %c0_2 = arith.constant 0 : index
    %1 = vector.load %arg2[%c0_1, %c0_2] : memref<8x1xi32, #tpu.memory_space<vmem>>, vector<8x1xi32>
    %2 = tpu.iota {dimensions = array<i32: 1>} : vector<8x32xi32>
    %3 = vector.broadcast %1 : vector<8x1xi32> to vector<8x32xi32>
    %4 = arith.cmpi eq, %2, %3 : vector<8x32xi32>
    %cst = arith.constant dense<0xFF800000> : vector<8xf32>
    %5 = vector.multi_reduction <maximumf>, %0, %cst [1] : vector<8x32xf32> to vector<8xf32>
    %6 = vector.shape_cast %5 : vector<8xf32> to vector<8x1xf32>
    %7 = vector.broadcast %6 : vector<8x1xf32> to vector<8x32xf32>
    %8 = arith.subf %0, %7 : vector<8x32xf32>
    %9 = math.exp %8 : vector<8x32xf32>
    %cst_3 = arith.constant dense<0.000000e+00> : vector<8xf32>
    %10 = vector.multi_reduction <add>, %9, %cst_3 [1] : vector<8x32xf32> to vector<8xf32>
    %11 = vector.shape_cast %10 : vector<8xf32> to vector<8x1xf32>
    %12 = math.log %11 : vector<8x1xf32>
    %13 = arith.addf %6, %12 : vector<8x1xf32>
    %cst_4 = arith.constant 0.000000e+00 : f32
    %14 = vector.broadcast %cst_4 : f32 to vector<8x32xf32>
    %15 = arith.select %4, %0, %14 : vector<8x32xi1>, vector<8x32xf32>
    %cst_5 = arith.constant dense<0.000000e+00> : vector<8xf32>
    %16 = vector.multi_reduction <add>, %15, %cst_5 [1] : vector<8x32xf32> to vector<8xf32>
    %17 = vector.shape_cast %16 : vector<8xf32> to vector<8x1xf32>
    %18 = arith.subf %13, %17 : vector<8x1xf32>
    %cst_6 = arith.constant 0.000000e+00 : f32
    %19 = vector.broadcast %cst_6 : f32 to vector<8x1xf32>
    %20 = arith.maximumf %18, %19 : vector<8x1xf32>
    %cst_7 = arith.constant 0.000000e+00 : f32
    %21 = vector.broadcast %cst_7 : f32 to vector<8x1xf32>
    %22 = arith.subf %21, %20 : vector<8x1xf32>
    %23 = math.exp %22 : vector<8x1xf32>
    %cst_8 = arith.constant 1.000000e+00 : f32
    %24 = vector.broadcast %cst_8 : f32 to vector<8x1xf32>
    %25 = arith.subf %24, %23 : vector<8x1xf32>
    %cst_9 = arith.constant 1.000000e+00 : f32
    %26 = vector.broadcast %cst_9 : f32 to vector<8x1xf32>
    %27 = arith.mulf %26, %25 : vector<8x1xf32>
    %28 = arith.mulf %27, %25 : vector<8x1xf32>
    %29 = arith.mulf %28, %20 : vector<8x1xf32>
    %cst_10 = arith.constant dense<0.000000e+00> : vector<1xf32>
    %30 = vector.multi_reduction <add>, %29, %cst_10 [0] : vector<8x1xf32> to vector<1xf32>
    %31 = vector.shape_cast %30 : vector<1xf32> to vector<1x1xf32>
    %32 = vector.shape_cast %31 : vector<1x1xf32> to vector<1x1x1xf32>
    %c0_11 = arith.constant 0 : index
    %c0_12 = arith.constant 0 : index
    %c0_13 = arith.constant 0 : index
    %33 = vector.load %arg3[%c0_11, %c0_12, %c0_13] : memref<1x1x1xf32, #tpu.memory_space<vmem>>, vector<1x1x1xf32>
    tpu.vector_store %arg3[%c0_11, %c0_12, %c0_13], %32 {strides = array<i32>} : memref<1x1x1xf32, #tpu.memory_space<vmem>>, vector<1x1x1xf32>,
    return
  }
  func.func @transform_0(%arg0: i32) -> (i32, i32) {
    %c0_i32 = arith.constant 0 : i32
    %c0_i32_0 = arith.constant 0 : i32
    return %arg0, %c0_i32 : i32, i32
  }
  func.func @transform_1(%arg0: i32) -> (i32, i32) {
    %c0_i32 = arith.constant 0 : i32
    %c0_i32_0 = arith.constant 0 : i32
    return %arg0, %c0_i32 : i32, i32
  }
  func.func @transform_2(%arg0: i32) -> (i32, i32, i32) {
    %c0_i32 = arith.constant 0 : i32
    %c0_i32_0 = arith.constant 0 : i32
    %c0_i32_1 = arith.constant 0 : i32
    return %arg0, %c0_i32, %c0_i32_0 : i32, i32, i32
  }
}

</mosaic_0001>

<llo_original>
// kernel: tpu_custom_call.1
$region0: #{tpu_custom_call.1}
  #allocation0 [shape = 'u32[]', space=smem, size = 0x4, offset = 0x4, fixed_abs, tag = 'smem constant byte address 0x4 - core index']
  #allocation1 [shape = 'u32[144,128]{1,0:T(1,128)}', space=vmem, size = 0x12000, scoped, tag = 'internal scratch']
  %s0 = inlined_call_operand.vmem [shape: f32[8,32], index: 0, kind: input, shape index: {}]
  %s1 = inlined_call_operand.vmem [shape: s32[8,1], index: 1, kind: input, shape index: {}]
  %s2 = inlined_call_operand.hbm [shape: f32[1,1,1], index: 2, kind: output, shape index: {}]
  %s3 = sld [smem:[#allocation0]]
  $region18: #{tpu_custom_call.1} parent=0
    _
  %s5 = ssub.s32 1, %s3
  %s6 = scalar_select 0, %s5, %s3
  $region1: #{tpu_custom_call.1} parent=0
    #allocation2 [shape = 'u8[512]{0}', space=vmem, size = 0x400, scoped, tag = 'output window, operand 0, single buffered']
    #allocation3 [shape = 's32[1]{0}', space=sflag, size = 0x4, scoped, tag = 'scoped memory for tpu_custom_call.1']
    %7 = vsyncpa [#allocation3], 0
    // Predicated region
    $region2: #{tpu_custom_call.1} parent=1 // pred_check
      _
    $region3: #{tpu_custom_call.1} parent=1 // pred_check_branch
      %9 = sbr.rel (0) target = $region5
    $region4: #{tpu_custom_call.1} parent=1 // pred_region
      _
    $region5: #{tpu_custom_call.1} parent=1 // pred_fallthru
      _
    // Predicated region
    $region6: #{tpu_custom_call.1} parent=1 // pred_check
      _
    $region7: #{tpu_custom_call.1} parent=1 // pred_check_branch
      %11 = sbr.rel (0) target = $region9
    $region8: #{tpu_custom_call.1} parent=1 // pred_region
      _
    $region9: #{tpu_custom_call.1} parent=1 // pred_fallthru
      _
    %v12 = vld [vmem:[%s0] sm:$0xff]
    %v13 = vld [vmem:[%s1] sm:$0xff]
    %v14 = vlaneseq
    %v15 = vand.u32 %v14, 127
    %16 = vset.pattern.permute.xlu0 0
    %17 = vperm.xlu0 %16, %v13
    %v18 = vpop.permute.xlu0 %17
    %vm19 = vcmp.eq.s32.totalorder %v15, %v18
    %vm20 = vcmask 261120
    %v21 = vsel %vm20, %v12, -inf
    %22 = vmax.xlane.f32.xlu0 %v21
    %v23 = vpop.xlane.xlu0 %22
    %v24 = vsub.f32 %v12, %v23
    %v25 = vmul.f32 %v24, 1.442695
    %v26 = vpow.pop %v25
    %v27 = vsel %vm20, %v26, 0.0
    %28 = vadd.xlane.f32.xlu0 %v27
    %v29 = vpop.xlane.xlu0 %28
    %v30 = vlog2.pop %v29
    %v31 = vmul.f32 %v30, 0.6931472
    %v32 = vadd.f32 %v23, %v31
    %v33 = vsel %vm19, %v12, 0.0
    %v34 = vsel %vm20, %v33, 0.0
    %35 = vadd.xlane.f32.xlu0 %v34
    %v36 = vpop.xlane.xlu0 %35
    %v37 = vsub.f32 %v32, %v36
    %v38 = vmax.f32 %v37, 0.0
    %v39 = vsub.f32 0.0, %v38
    %v40 = vmul.f32 %v39, 1.442695
    %v41 = vpow.pop %v40
    %v42 = vsub.f32 1.0, %v41
    %v43 = vmul.f32 %v42, %v42
    %v44 = vmul.f32 %v43, %v38
    %v45 = vrot.slane %v44, 4
    %v46 = vadd.f32 %v44, %v45
    %v47 = vrot.slane %v46, 2
    %v48 = vadd.f32 %v46, %v47
    %v49 = vrot.slane %v48, 1
    %v50 = vadd.f32 %v48, %v49
    %vm51 = vcmask 0
    %52 = vst.msk [vmem:[#allocation2] sm:$0x1] %vm51, %v50
    // Predicated region
    $region10: #{tpu_custom_call.1} parent=1 // pred_check
      _
    $region11: #{tpu_custom_call.1} parent=1 // pred_check_branch
      %54 = sbr.rel (0) target = $region13
    $region12: #{tpu_custom_call.1} parent=1 // pred_region
      %s56 = ssub.s32 16, 16
      %57 = vsyncadd [#allocation3], %s56
      %s59 = sshll.u32 [#allocation2], 4
      %s60 = int_to_ptr.vmem [resolvable:$true] %s59
      %62 = dma.vmem_to_hbm [thread:$0]  %s60, 16, %s2, [#allocation3]
    $region13: #{tpu_custom_call.1} parent=1 // pred_fallthru
      _
    // Predicated region
    $region14: #{tpu_custom_call.1} parent=1 // pred_check
      _
    $region15: #{tpu_custom_call.1} parent=1 // pred_check_branch
      %64 = sbr.rel (0) target = $region17
    $region16: #{tpu_custom_call.1} parent=1 // pred_region
      %65 = dma.done [#allocation3], 16
    $region17: #{tpu_custom_call.1} parent=1 // pred_fallthru
      _
    %66 = vsyncpa [#allocation3], 1

</llo_original>
